<compile_context>
chip_gen: v7x
topology: tpu7x:2x2x1
jax: 0.10.0
libtpu: 0.0.40
codegen_flags: <defaults>
</compile_context>

<pallas_src>
import math
import jax
import jax.numpy as jnp
from jax.experimental import pallas as pl
from jax.experimental.pallas import tpu as pltpu


def _pick_tile(dim, candidates=(512, 256, 128)):
    """Largest MXU-friendly tile that evenly divides `dim`, else the full dim.

    512/256 align with v6e/v7x's 256-wide MXU; 128 covers v5e.  Falling back to
    the full dim keeps the (8,128) BlockSpec constraint satisfied (block ==
    full array dim) for small shapes.
    """
    for c in candidates:
        if dim >= c and dim % c == 0:
            return c
    return dim


# ----------------------------------------------------------------------------
# Attention kernel: fused QKV projection + per-head softmax attention
# ----------------------------------------------------------------------------
def _make_attention_kernel(num_heads, head_dim):
    scale = 1.0 / math.sqrt(head_dim)
    D = num_heads * head_dim

    def attn_kernel(x_ref, wqkv_ref, bqkv_ref, o_ref):
        x = x_ref[0]  # (S, D)

        # One wide (S, D) x (D, 3D) projection instead of three narrow ones.
        qkv = (
            jnp.dot(x, wqkv_ref[...], preferred_element_type=jnp.float32)
            + bqkv_ref[...]
        )
        # Fold 1/sqrt(dh) into Q once (S*D mults, not H*S*S).
        q = qkv[:, 0:D] * scale
        k = qkv[:, D:2 * D]
        v = qkv[:, 2 * D:3 * D]

        # Per-head attention; heads are static lane slices (matches torch's
        # view + permute).  Contexts are gathered and written back with a
        # single lane-dense (S, D) store.
        # TODO(synk): for large H / long S switch to a flash-style tiling over
        # the key axis to bound the (S, S) score buffer.
        ctxs = []
        for h in range(num_heads):
            sl = slice(h * head_dim, (h + 1) * head_dim)
            q_h = q[:, sl]  # (S, dh)
            k_h = k[:, sl]  # (S, dh)
            v_h = v[:, sl]  # (S, dh)

            scores = jnp.einsum(
                "qd,kd->qk", q_h, k_h, preferred_element_type=jnp.float32
            )  # (S, S)

            m = jnp.max(scores, axis=-1, keepdims=True)
            e = jnp.exp(scores - m)
            denom = jnp.sum(e, axis=-1, keepdims=True)
            # Divide via EUP reciprocal + VPU multiply (frees VALU slots).
            probs = e * pl.reciprocal(denom, approx=True)
            # dropout(p=0.1) is identity in eval mode.

            ctxs.append(jnp.dot(probs, v_h, preferred_element_type=jnp.float32))

        o_ref[0] = jnp.concatenate(ctxs, axis=-1).astype(o_ref.dtype)

    return attn_kernel


def self_attention(x, wq, bq, wk, bk, wv, bv, *, num_heads):
    B, S, D = x.shape
    assert D % num_heads == 0, "hidden size must be divisible by num_heads"
    head_dim = D // num_heads

    # Fuse the three projection weights/biases into one slab (cheap XLA op).
    wqkv = jnp.concatenate([wq, wk, wv], axis=1)   # (D, 3D)
    bqkv = jnp.concatenate([bq, bk, bv], axis=1)   # (1, 3D)

    kernel = _make_attention_kernel(num_heads, head_dim)
    full2d = lambda b: (0, 0)

    return pl.pallas_call(
        kernel,
        out_shape=jax.ShapeDtypeStruct((B, S, D), jnp.float32),
        grid=(B,),
        in_specs=[
            pl.BlockSpec((1, S, D), lambda b: (b, 0, 0)),
            pl.BlockSpec((D, 3 * D), full2d),
            pl.BlockSpec((1, 3 * D), full2d),
        ],
        out_specs=pl.BlockSpec((1, S, D), lambda b: (b, 0, 0)),
        compiler_params=pltpu.CompilerParams(dimension_semantics=("parallel",)),
    )(x, wqkv, bqkv)


# ----------------------------------------------------------------------------
# Tiled Linear + ReLU kernel (first hidden layer: input_dim -> hidden_size)
# ----------------------------------------------------------------------------
def linear_relu_kernel(x_ref, w_ref, b_ref, o_ref):
    y = jnp.dot(x_ref[...], w_ref[...], preferred_element_type=jnp.float32)
    y = y + b_ref[...]
    o_ref[...] = jnp.maximum(y, 0.0).astype(o_ref.dtype)


def linear_relu(x2d, w, b):
    M, K = x2d.shape
    N = w.shape[1]
    tm = _pick_tile(M)
    tn = _pick_tile(N)
    # TODO(synk): add a K grid axis + VMEM accumulator for very large D_in.
    return pl.pallas_call(
        linear_relu_kernel,
        out_shape=jax.ShapeDtypeStruct((M, N), jnp.float32),
        grid=(M // tm, N // tn),
        in_specs=[
            pl.BlockSpec((tm, K), lambda i, j: (i, 0)),
            pl.BlockSpec((K, tn), lambda i, j: (0, j)),
            pl.BlockSpec((1, tn), lambda i, j: (0, j)),
        ],
        out_specs=pl.BlockSpec((tm, tn), lambda i, j: (i, j)),
        compiler_params=pltpu.CompilerParams(
            dimension_semantics=("parallel", "parallel")),
    )(x2d, w, b)


# ----------------------------------------------------------------------------
# Fused stack of (hidden -> hidden) Linear+ReLU layers in one pallas_call.
# Grid = (M tiles, layers); the activation tile lives in the output VMEM block
# across the layer axis, so intermediate activations never touch HBM.
# ----------------------------------------------------------------------------
def stack_kernel(x_ref, w_ref, b_ref, o_ref):
    @pl.when(pl.program_id(1) == 0)
    def _():
        o_ref[...] = x_ref[...]

    y = jnp.dot(o_ref[...], w_ref[0], preferred_element_type=jnp.float32)
    y = y + b_ref[0]
    o_ref[...] = jnp.maximum(y, 0.0).astype(o_ref.dtype)


def linear_relu_stack(x2d, w_stack, b_stack):
    M, H = x2d.shape
    L = w_stack.shape[0]
    tm = _pick_tile(M)
    # TODO(synk): tile H as well for very large hidden sizes so the (H, H)
    # weight block fits v7x's 64 MiB VMEM.
    return pl.pallas_call(
        stack_kernel,
        out_shape=jax.ShapeDtypeStruct((M, H), jnp.float32),
        grid=(M // tm, L),
        in_specs=[
            pl.BlockSpec((tm, H), lambda i, l: (i, 0)),
            pl.BlockSpec((1, H, H), lambda i, l: (l, 0, 0)),
            pl.BlockSpec((1, 1, H), lambda i, l: (l, 0, 0)),
        ],
        out_specs=pl.BlockSpec((tm, H), lambda i, l: (i, 0)),
        compiler_params=pltpu.CompilerParams(
            dimension_semantics=("parallel", "arbitrary")),
    )(x2d, w_stack, b_stack)


# ----------------------------------------------------------------------------
# TTTModel forward (glue in plain JAX, hot paths in Pallas kernels)
# ----------------------------------------------------------------------------
def ttt_model_forward(input_emb, params, *, num_heads):
    B, S, D = input_emb.shape

    hidden = self_attention(
        input_emb,
        params["wq"], params["bq"],
        params["wk"], params["bk"],
        params["wv"], params["bv"],
        num_heads=num_heads,
    )

    h2d = hidden.reshape(B * S, D)

    layers = params["layers"]
    # Layer 0: (input_dim -> hidden_size), tiled/pipelined linear + ReLU.
    w0, b0 = layers[0]
    h2d = linear_relu(h2d, w0, b0)

    # Layers 1..L-1: uniform (hidden -> hidden), fused into one pallas_call.
    rest = layers[1:]
    if rest:
        w_stack = jnp.stack([w for (w, _) in rest], axis=0)   # (L-1, H, H)
        b_stack = jnp.stack([b for (_, b) in rest], axis=0)   # (L-1, 1, H)
        h2d = linear_relu_stack(h2d, w_stack, b_stack)

    last_hidden_state = h2d.reshape(B, S, -1)
    # TODO(synk): BaseModelOutputWithPast is a plain dataclass wrapper; we return a dict.
    return {"last_hidden_state": last_hidden_state}


# ----------------------------------------------------------------------------
# Pure-JAX reference (for the correctness check in __main__)
# ----------------------------------------------------------------------------
def ttt_model_reference(x, params, *, num_heads):
    B, S, D = x.shape
    dh = D // num_heads

    q = x @ params["wq"] + params["bq"]
    k = x @ params["wk"] + params["bk"]
    v = x @ params["wv"] + params["bv"]

    def split(t):
        return t.reshape(B, S, num_heads, dh).transpose(0, 2, 1, 3)

    qh, kh, vh = split(q), split(k), split(v)
    scores = jnp.einsum("bhqd,bhkd->bhqk", qh, kh) / math.sqrt(dh)
    probs = jax.nn.softmax(scores, axis=-1)
    ctx = jnp.einsum("bhqk,bhkd->bhqd", probs, vh)
    h = ctx.transpose(0, 2, 1, 3).reshape(B, S, D)

    for (w, b) in params["layers"]:
        h = jnp.maximum(h @ w + b, 0.0)
    return h


def init_params(key, input_dim, hidden_size, num_hidden_layers):
    keys = jax.random.split(key, 8 + 2 * num_hidden_layers)
    scale = 0.02

    def w(k, shape):
        return (scale * jax.random.normal(k, shape)).astype(jnp.float32)

    params = {
        "wq": w(keys[0], (input_dim, input_dim)),
        "bq": w(keys[1], (1, input_dim)),
        "wk": w(keys[2], (input_dim, input_dim)),
        "bk": w(keys[3], (1, input_dim)),
        "wv": w(keys[4], (input_dim, input_dim)),
        "bv": w(keys[5], (1, input_dim)),
        "layers": [],
    }
    for i in range(num_hidden_layers):
        d_in = input_dim if i == 0 else hidden_size
        params["layers"].append(
            (
                w(keys[6 + 2 * i], (d_in, hidden_size)),
                w(keys[7 + 2 * i], (1, hidden_size)),
            )
        )
    return params


if __name__ == "__main__":
    B, S = 2, 8
    input_dim = 32
    hidden_size = 32
    num_heads = 4
    num_hidden_layers = 2

    key = jax.random.PRNGKey(0)
    k_x, k_p = jax.random.split(key)
    x = jax.random.normal(k_x, (B, S, input_dim), dtype=jnp.float32)
    params = init_params(k_p, input_dim, hidden_size, num_hidden_layers)

    out = ttt_model_forward(x, params, num_heads=num_heads)
    last = out["last_hidden_state"]
    jax.block_until_ready(last)
    assert last.shape == (B, S, hidden_size)

    ref = ttt_model_reference(x, params, num_heads=num_heads)
    jax.block_until_ready(ref)
    # approx reciprocal in softmax -> loose tolerance
    assert jnp.allclose(last, ref, rtol=5e-3, atol=5e-3), "mismatch vs JAX reference"

    print("KERNEL_OK")
</pallas_src>

<mosaic_0001>
module attributes {stable_mosaic.version = 11 : i64} {
  func.func @attn_kernel(%arg0: i32, %arg1: memref<1x8x32xf32, #tpu.memory_space<vmem>>, %arg2: memref<32x96xf32, #tpu.memory_space<vmem>>, %arg3: memref<1x96xf32, #tpu.memory_space<vmem>>, %arg4: memref<1x8x32xf32, #tpu.memory_space<vmem>>) attributes {dimension_semantics = [#tpu.dimension_semantics<parallel>], iteration_bounds = array<i64: 2>, scalar_prefetch = 0 : i64, scratch_operands = 0 : i64, tpu.core_type = #tpu.core_type<tc>, window_params = [{transform_indices = @transform_0, window_bounds = array<i64: 1, 8, 32>}, {pipeline_mode = #tpu.pipeline_mode<synchronous>, transform_indices = @transform_1, window_bounds = array<i64: 32, 96>}, {pipeline_mode = #tpu.pipeline_mode<synchronous>, transform_indices = @transform_2, window_bounds = array<i64: 1, 96>}, {transform_indices = @transform_3, window_bounds = array<i64: 1, 8, 32>}]} {
    %c0 = arith.constant 0 : index
    %c0_0 = arith.constant 0 : index
    %c0_1 = arith.constant 0 : index
    %0 = vector.load %arg1[%c0, %c0_0, %c0_1] : memref<1x8x32xf32, #tpu.memory_space<vmem>>, vector<1x8x32xf32>
    %1 = vector.shape_cast %0 : vector<1x8x32xf32> to vector<8x32xf32>
    %c0_2 = arith.constant 0 : index
    %c0_3 = arith.constant 0 : index
    %2 = vector.load %arg2[%c0_2, %c0_3] : memref<32x96xf32, #tpu.memory_space<vmem>>, vector<32x96xf32>
    %cst = arith.constant dense<0.000000e+00> : vector<8x96xf32>
    %3 = tpu.matmul %1, %2, %cst {dimension_numbers = #tpu.dot_dimension_numbers<[1], [0], [0], [1], [0, 0, 1, 1], [], []>} : vector<8x32xf32>, vector<32x96xf32>, vector<8x96xf32> -> vector<8x96xf32>
    %c0_4 = arith.constant 0 : index
    %c0_5 = arith.constant 0 : index
    %4 = vector.load %arg3[%c0_4, %c0_5] : memref<1x96xf32, #tpu.memory_space<vmem>>, vector<1x96xf32>
    %5 = vector.broadcast %4 : vector<1x96xf32> to vector<8x96xf32>
    %6 = arith.addf %3, %5 : vector<8x96xf32>
    %7 = vector.extract_strided_slice %6 {offsets = [0, 0], sizes = [8, 32], strides = [1, 1]} : vector<8x96xf32> to vector<8x32xf32>
    %cst_6 = arith.constant 0.353553385 : f32
    %8 = vector.broadcast %cst_6 : f32 to vector<8x32xf32>
    %9 = arith.mulf %7, %8 : vector<8x32xf32>
    %10 = vector.extract_strided_slice %6 {offsets = [0, 32], sizes = [8, 32], strides = [1, 1]} : vector<8x96xf32> to vector<8x32xf32>
    %11 = vector.extract_strided_slice %6 {offsets = [0, 64], sizes = [8, 32], strides = [1, 1]} : vector<8x96xf32> to vector<8x32xf32>
    %12 = vector.extract_strided_slice %9 {offsets = [0, 0], sizes = [8, 8], strides = [1, 1]} : vector<8x32xf32> to vector<8x8xf32>
    %13 = vector.extract_strided_slice %10 {offsets = [0, 0], sizes = [8, 8], strides = [1, 1]} : vector<8x32xf32> to vector<8x8xf32>
    %14 = vector.extract_strided_slice %11 {offsets = [0, 0], sizes = [8, 8], strides = [1, 1]} : vector<8x32xf32> to vector<8x8xf32>
    "tpu.trace_start"() <{level = 10 : i32, message = "qd,kd->qk"}> : () -> ()
    %cst_7 = arith.constant dense<0.000000e+00> : vector<8x8xf32>
    %15 = tpu.matmul %12, %13, %cst_7 {dimension_numbers = #tpu.dot_dimension_numbers<[1], [1], [0], [0], [0, 0, 1, 0], [], []>} : vector<8x8xf32>, vector<8x8xf32>, vector<8x8xf32> -> vector<8x8xf32>
    "tpu.trace_stop"() : () -> ()
    %cst_8 = arith.constant dense<0xFF800000> : vector<8xf32>
    %16 = vector.multi_reduction <maximumf>, %15, %cst_8 [1] : vector<8x8xf32> to vector<8xf32>
    %17 = vector.shape_cast %16 : vector<8xf32> to vector<8x1xf32>
    %18 = vector.broadcast %17 : vector<8x1xf32> to vector<8x8xf32>
    %19 = arith.subf %15, %18 : vector<8x8xf32>
    %20 = math.exp %19 : vector<8x8xf32>
    %cst_9 = arith.constant dense<0.000000e+00> : vector<8xf32>
    %21 = vector.multi_reduction <add>, %20, %cst_9 [1] : vector<8x8xf32> to vector<8xf32>
    %22 = vector.shape_cast %21 : vector<8xf32> to vector<8x1xf32>
    %23 = tpu.reciprocal %22 {approx = true} : vector<8x1xf32> -> vector<8x1xf32>
    %24 = vector.broadcast %23 : vector<8x1xf32> to vector<8x8xf32>
    %25 = arith.mulf %20, %24 : vector<8x8xf32>
    %cst_10 = arith.constant dense<0.000000e+00> : vector<8x8xf32>
    %26 = tpu.matmul %25, %14, %cst_10 {dimension_numbers = #tpu.dot_dimension_numbers<[1], [0], [0], [1], [0, 0, 1, 1], [], []>} : vector<8x8xf32>, vector<8x8xf32>, vector<8x8xf32> -> vector<8x8xf32>
    %27 = vector.extract_strided_slice %9 {offsets = [0, 8], sizes = [8, 8], strides = [1, 1]} : vector<8x32xf32> to vector<8x8xf32>
    %28 = vector.extract_strided_slice %10 {offsets = [0, 8], sizes = [8, 8], strides = [1, 1]} : vector<8x32xf32> to vector<8x8xf32>
    %29 = vector.extract_strided_slice %11 {offsets = [0, 8], sizes = [8, 8], strides = [1, 1]} : vector<8x32xf32> to vector<8x8xf32>
    "tpu.trace_start"() <{level = 10 : i32, message = "qd,kd->qk"}> : () -> ()
    %cst_11 = arith.constant dense<0.000000e+00> : vector<8x8xf32>
    %30 = tpu.matmul %27, %28, %cst_11 {dimension_numbers = #tpu.dot_dimension_numbers<[1], [1], [0], [0], [0, 0, 1, 0], [], []>} : vector<8x8xf32>, vector<8x8xf32>, vector<8x8xf32> -> vector<8x8xf32>
    "tpu.trace_stop"() : () -> ()
    %cst_12 = arith.constant dense<0xFF800000> : vector<8xf32>
    %31 = vector.multi_reduction <maximumf>, %30, %cst_12 [1] : vector<8x8xf32> to vector<8xf32>
    %32 = vector.shape_cast %31 : vector<8xf32> to vector<8x1xf32>
    %33 = vector.broadcast %32 : vector<8x1xf32> to vector<8x8xf32>
    %34 = arith.subf %30, %33 : vector<8x8xf32>
    %35 = math.exp %34 : vector<8x8xf32>
    %cst_13 = arith.constant dense<0.000000e+00> : vector<8xf32>
    %36 = vector.multi_reduction <add>, %35, %cst_13 [1] : vector<8x8xf32> to vector<8xf32>
    %37 = vector.shape_cast %36 : vector<8xf32> to vector<8x1xf32>
    %38 = tpu.reciprocal %37 {approx = true} : vector<8x1xf32> -> vector<8x1xf32>
    %39 = vector.broadcast %38 : vector<8x1xf32> to vector<8x8xf32>
    %40 = arith.mulf %35, %39 : vector<8x8xf32>
    %cst_14 = arith.constant dense<0.000000e+00> : vector<8x8xf32>
    %41 = tpu.matmul %40, %29, %cst_14 {dimension_numbers = #tpu.dot_dimension_numbers<[1], [0], [0], [1], [0, 0, 1, 1], [], []>} : vector<8x8xf32>, vector<8x8xf32>, vector<8x8xf32> -> vector<8x8xf32>
    %42 = vector.extract_strided_slice %9 {offsets = [0, 16], sizes = [8, 8], strides = [1, 1]} : vector<8x32xf32> to vector<8x8xf32>
    %43 = vector.extract_strided_slice %10 {offsets = [0, 16], sizes = [8, 8], strides = [1, 1]} : vector<8x32xf32> to vector<8x8xf32>
    %44 = vector.extract_strided_slice %11 {offsets = [0, 16], sizes = [8, 8], strides = [1, 1]} : vector<8x32xf32> to vector<8x8xf32>
    "tpu.trace_start"() <{level = 10 : i32, message = "qd,kd->qk"}> : () -> ()
    %cst_15 = arith.constant dense<0.000000e+00> : vector<8x8xf32>
    %45 = tpu.matmul %42, %43, %cst_15 {dimension_numbers = #tpu.dot_dimension_numbers<[1], [1], [0], [0], [0, 0, 1, 0], [], []>} : vector<8x8xf32>, vector<8x8xf32>, vector<8x8xf32> -> vector<8x8xf32>
    "tpu.trace_stop"() : () -> ()
    %cst_16 = arith.constant dense<0xFF800000> : vector<8xf32>
    %46 = vector.multi_reduction <maximumf>, %45, %cst_16 [1] : vector<8x8xf32> to vector<8xf32>
    %47 = vector.shape_cast %46 : vector<8xf32> to vector<8x1xf32>
    %48 = vector.broadcast %47 : vector<8x1xf32> to vector<8x8xf32>
    %49 = arith.subf %45, %48 : vector<8x8xf32>
    %50 = math.exp %49 : vector<8x8xf32>
    %cst_17 = arith.constant dense<0.000000e+00> : vector<8xf32>
    %51 = vector.multi_reduction <add>, %50, %cst_17 [1] : vector<8x8xf32> to vector<8xf32>
    %52 = vector.shape_cast %51 : vector<8xf32> to vector<8x1xf32>
    %53 = tpu.reciprocal %52 {approx = true} : vector<8x1xf32> -> vector<8x1xf32>
    %54 = vector.broadcast %53 : vector<8x1xf32> to vector<8x8xf32>
    %55 = arith.mulf %50, %54 : vector<8x8xf32>
    %cst_18 = arith.constant dense<0.000000e+00> : vector<8x8xf32>
    %56 = tpu.matmul %55, %44, %cst_18 {dimension_numbers = #tpu.dot_dimension_numbers<[1], [0], [0], [1], [0, 0, 1, 1], [], []>} : vector<8x8xf32>, vector<8x8xf32>, vector<8x8xf32> -> vector<8x8xf32>
    %57 = vector.extract_strided_slice %9 {offsets = [0, 24], sizes = [8, 8], strides = [1, 1]} : vector<8x32xf32> to vector<8x8xf32>
    %58 = vector.extract_strided_slice %10 {offsets = [0, 24], sizes = [8, 8], strides = [1, 1]} : vector<8x32xf32> to vector<8x8xf32>
    %59 = vector.extract_strided_slice %11 {offsets = [0, 24], sizes = [8, 8], strides = [1, 1]} : vector<8x32xf32> to vector<8x8xf32>
    "tpu.trace_start"() <{level = 10 : i32, message = "qd,kd->qk"}> : () -> ()
    %cst_19 = arith.constant dense<0.000000e+00> : vector<8x8xf32>
    %60 = tpu.matmul %57, %58, %cst_19 {dimension_numbers = #tpu.dot_dimension_numbers<[1], [1], [0], [0], [0, 0, 1, 0], [], []>} : vector<8x8xf32>, vector<8x8xf32>, vector<8x8xf32> -> vector<8x8xf32>
    "tpu.trace_stop"() : () -> ()
    %cst_20 = arith.constant dense<0xFF800000> : vector<8xf32>
    %61 = vector.multi_reduction <maximumf>, %60, %cst_20 [1] : vector<8x8xf32> to vector<8xf32>
    %62 = vector.shape_cast %61 : vector<8xf32> to vector<8x1xf32>
    %63 = vector.broadcast %62 : vector<8x1xf32> to vector<8x8xf32>
    %64 = arith.subf %60, %63 : vector<8x8xf32>
    %65 = math.exp %64 : vector<8x8xf32>
    %cst_21 = arith.constant dense<0.000000e+00> : vector<8xf32>
    %66 = vector.multi_reduction <add>, %65, %cst_21 [1] : vector<8x8xf32> to vector<8xf32>
    %67 = vector.shape_cast %66 : vector<8xf32> to vector<8x1xf32>
    %68 = tpu.reciprocal %67 {approx = true} : vector<8x1xf32> -> vector<8x1xf32>
    %69 = vector.broadcast %68 : vector<8x1xf32> to vector<8x8xf32>
    %70 = arith.mulf %65, %69 : vector<8x8xf32>
    %cst_22 = arith.constant dense<0.000000e+00> : vector<8x8xf32>
    %71 = tpu.matmul %70, %59, %cst_22 {dimension_numbers = #tpu.dot_dimension_numbers<[1], [0], [0], [1], [0, 0, 1, 1], [], []>} : vector<8x8xf32>, vector<8x8xf32>, vector<8x8xf32> -> vector<8x8xf32>
    %72 = tpu.concatenate %26, %41, %56, %71 in 1 : vector<8x8xf32>, vector<8x8xf32>, vector<8x8xf32>, vector<8x8xf32> -> vector<8x32xf32>
    %c0_23 = arith.constant 0 : index
    %c0_24 = arith.constant 0 : index
    %c0_25 = arith.constant 0 : index
    %73 = vector.load %arg4[%c0_23, %c0_24, %c0_25] : memref<1x8x32xf32, #tpu.memory_space<vmem>>, vector<1x8x32xf32>
    %74 = vector.shape_cast %73 : vector<1x8x32xf32> to vector<8x32xf32>
    %75 = vector.shape_cast %72 : vector<8x32xf32> to vector<1x8x32xf32>
    tpu.vector_store %arg4[%c0_23, %c0_24, %c0_25], %75 {strides = array<i32>} : memref<1x8x32xf32, #tpu.memory_space<vmem>>, vector<1x8x32xf32>,
    return
  }
  func.func @transform_0(%arg0: i32) -> (i32, i32, i32) {
    %c0_i32 = arith.constant 0 : i32
    %c0_i32_0 = arith.constant 0 : i32
    %c0_i32_1 = arith.constant 0 : i32
    return %arg0, %c0_i32, %c0_i32_0 : i32, i32, i32
  }
  func.func @transform_1(%arg0: i32) -> (i32, i32) {
    %c0_i32 = arith.constant 0 : i32
    %c0_i32_0 = arith.constant 0 : i32
    %c0_i32_1 = arith.constant 0 : i32
    return %c0_i32, %c0_i32_0 : i32, i32
  }
  func.func @transform_2(%arg0: i32) -> (i32, i32) {
    %c0_i32 = arith.constant 0 : i32
    %c0_i32_0 = arith.constant 0 : i32
    %c0_i32_1 = arith.constant 0 : i32
    return %c0_i32, %c0_i32_0 : i32, i32
  }
  func.func @transform_3(%arg0: i32) -> (i32, i32, i32) {
    %c0_i32 = arith.constant 0 : i32
    %c0_i32_0 = arith.constant 0 : i32
    %c0_i32_1 = arith.constant 0 : i32
    return %arg0, %c0_i32, %c0_i32_0 : i32, i32, i32
  }
}

</mosaic_0001>

<llo_original>
// kernel: tpu_custom_call.1
$region0: #{tpu_custom_call.1}
  #allocation0 [shape = 'u32[]', space=smem, size = 0x4, offset = 0x4, fixed_abs, tag = 'smem constant byte address 0x4 - core index']
  #allocation1 [shape = 'u32[144,128]{1,0:T(1,128)}', space=vmem, size = 0x12000, scoped, tag = 'internal scratch']
  %s0 = inlined_call_operand.hbm [shape: f32[2,8,32], index: 0, kind: input, shape index: {}]
  %s1 = inlined_call_operand.hbm [shape: f32[32,96], index: 1, kind: input, shape index: {}]
  %s2 = inlined_call_operand.vmem [shape: f32[1,96], index: 2, kind: input, shape index: {}]
  %s3 = inlined_call_operand.hbm [shape: f32[2,8,32], index: 3, kind: output, shape index: {}]
  %s4 = sld [smem:[#allocation0]]
  $region53: #{tpu_custom_call.1} parent=0
    _
  %s6 = ssub.s32 1, %s4
  %s7 = scalar_select 0, %s6, %s4
  $region1: #{tpu_custom_call.1} parent=0
    #allocation2 [shape = 'u8[8192]{0}', space=vmem, size = 0x2000, scoped, tag = 'input window, operand 0']
    #allocation3 [shape = 's32[2]{0}', space=sflag, size = 0x8, scoped, tag = 'scoped memory for tpu_custom_call.1']
    #allocation4 [shape = 's32[2]{0}', space=sflag, size = 0x8, scoped, tag = 'scoped memory for tpu_custom_call.1']
    #allocation5 [shape = 'u8[16384]{0}', space=vmem, size = 0x4000, scoped, tag = 'input window, operand 1, single buffered']
    #allocation6 [shape = 's32[1]{0}', space=sflag, size = 0x4, scoped, tag = 'scoped memory for tpu_custom_call.1']
    #allocation7 [shape = 'u8[8192]{0}', space=vmem, size = 0x2000, scoped, tag = 'output window, operand 0']
    %8 = vsyncpa [#allocation3], 0
    %s9 = scalar_lea.sflag [#allocation3], 1
    %10 = vsyncpa %s9, 0
    %11 = vsyncpa [#allocation6], 0
    %12 = vsyncpa [#allocation4], 0
    %s13 = scalar_lea.sflag [#allocation4], 1
    %14 = vsyncpa %s13, 0
    loop: start=0, step=1, limit=4
    $region2: #{tpu_custom_call.1} parent=1 // loop_pre_header
      _
    $region3: #{tpu_custom_call.1} parent=1 // loop_header
      %s16 = sphi 0, %s20
      %p17 = scmp.ge.s32.totalorder %s16, 4
      %s26 = sphi 0, %s28
      %s29 = sphi 0, %s26
      %s30 = sphi 0, %s29
      %s46 = sphi 0, %s30
      %s50 = sphi 0, %s50
      %s52 = sphi 0, %s50
      %s53 = sphi 0, %s52
      %s67 = sphi 0, %s53
      %s71 = sphi 0, %s71
      %s73 = sphi 0, %s71
      %s74 = sphi 0, %s73
      %s88 = sphi 0, %s74
      %s94 = sphi 0, %s96
      %s97 = sphi 0, %s94
      %s98 = sphi 0, %s97
      %s114 = sphi 0, %s98
    $region4: #{tpu_custom_call.1} parent=1 // loop_header_branch
      %19 = sbr.rel (%p17) target = $region8
    $region5: #{tpu_custom_call.1} parent=1 // loop_body
      %s21 = ssub.s32 %s16, 1
      %s22 = ssub.s32 %s16, 2
      %s23 = sadd.s32 %s16, 1
      %s24 = ssub.s32 %s16, %s23
      %p25 = scmp.eq.s32.totalorder %s24, 0
      %s27 = sadd.s32 %s26, 1
      %s28 = scalar_select %p25, %s26, %s27
      %p31 = pneg %p25
      %p32 = scmp.eq.s32.totalorder %s16, 1
      %p33 = por %p31, %p32
      %p34 = scmp.ne.s32.totalorder %s26, %s29
      %p35 = scmp.eq.s32.totalorder %s16, 0
      %p36 = por %p34, %p35
      %p37 = scmp.ne.s32.totalorder %s26, %s29
      %p38 = scmp.eq.s32.totalorder %s21, 1
      %p39 = por %p37, %p38
      %p40 = scmp.ne.s32.totalorder %s29, %s30
      %p41 = scmp.eq.s32.totalorder %s21, 0
      %p42 = por %p40, %p41
      %p43 = scmp.ne.s32.totalorder %s29, %s30
      %p44 = scmp.eq.s32.totalorder %s22, 1
      %p45 = por %p43, %p44
      %p47 = scmp.ne.s32.totalorder %s30, %s46
      %p48 = scmp.eq.s32.totalorder %s22, 0
      %p49 = por %p47, %p48
      %s51 = sadd.s32 %s50, 1
      %p54 = scmp.eq.s32.totalorder %s16, 1
      %p55 = scmp.ne.s32.totalorder %s50, %s52
      %p56 = scmp.eq.s32.totalorder %s16, 0
      %p57 = por %p55, %p56
      %p58 = scmp.ne.s32.totalorder %s50, %s52
      %p59 = scmp.eq.s32.totalorder %s21, 1
      %p60 = por %p58, %p59
      %p61 = scmp.ne.s32.totalorder %s52, %s53
      %p62 = scmp.eq.s32.totalorder %s21, 0
      %p63 = por %p61, %p62
      %p64 = scmp.ne.s32.totalorder %s52, %s53
      %p65 = scmp.eq.s32.totalorder %s22, 1
      %p66 = por %p64, %p65
      %p68 = scmp.ne.s32.totalorder %s53, %s67
      %p69 = scmp.eq.s32.totalorder %s22, 0
      %p70 = por %p68, %p69
      %s72 = sadd.s32 %s71, 1
      %p75 = scmp.eq.s32.totalorder %s16, 1
      %p76 = scmp.ne.s32.totalorder %s71, %s73
      %p77 = scmp.eq.s32.totalorder %s16, 0
      %p78 = por %p76, %p77
      %p79 = scmp.ne.s32.totalorder %s71, %s73
      %p80 = scmp.eq.s32.totalorder %s21, 1
      %p81 = por %p79, %p80
      %p82 = scmp.ne.s32.totalorder %s73, %s74
      %p83 = scmp.eq.s32.totalorder %s21, 0
      %p84 = por %p82, %p83
      %p85 = scmp.ne.s32.totalorder %s73, %s74
      %p86 = scmp.eq.s32.totalorder %s22, 1
      %p87 = por %p85, %p86
      %p89 = scmp.ne.s32.totalorder %s74, %s88
      %p90 = scmp.eq.s32.totalorder %s22, 0
      %p91 = por %p89, %p90
      %s92 = ssub.s32 %s16, %s23
      %p93 = scmp.eq.s32.totalorder %s92, 0
      %s95 = sadd.s32 %s94, 1
      %s96 = scalar_select %p93, %s94, %s95
      %p99 = pneg %p93
      %p100 = scmp.eq.s32.totalorder %s16, 1
      %p101 = por %p99, %p100
      %p102 = scmp.ne.s32.totalorder %s94, %s97
      %p103 = scmp.eq.s32.totalorder %s16, 0
      %p104 = por %p102, %p103
      %p105 = scmp.ne.s32.totalorder %s94, %s97
      %p106 = scmp.eq.s32.totalorder %s21, 1
      %p107 = por %p105, %p106
      %p108 = scmp.ne.s32.totalorder %s97, %s98
      %p109 = scmp.eq.s32.totalorder %s21, 0
      %p110 = por %p108, %p109
      %p111 = scmp.ne.s32.totalorder %s97, %s98
      %p112 = scmp.eq.s32.totalorder %s22, 1
      %p113 = por %p111, %p112
      %p115 = scmp.ne.s32.totalorder %s98, %s114
      %p116 = scmp.eq.s32.totalorder %s22, 0
      %p117 = por %p115, %p116
      %p118 = scmp.le.s32.totalorder 1, %s16
      %p119 = scmp.lt.s32.totalorder %s16, 3
      %p120 = pnand %p118, %p119
      %p121 = pneg %p120
      // Predicated region
      $region9: #{tpu_custom_call.1} parent=5 // pred_check
        _
      $region10: #{tpu_custom_call.1} parent=5 // pred_check_branch
        %123 = sbr.rel (%p120) target = $region12
      $region11: #{tpu_custom_call.1} parent=5 // pred_region
        %s124 = ssub.s32 %s16, 1
        // Predicated region
        $region13: #{tpu_custom_call.1} parent=11 // pred_check
          %p125 = pneg %p63
        $region14: #{tpu_custom_call.1} parent=11 // pred_check_branch
          %127 = sbr.rel (%p125) target = $region16
        $region15: #{tpu_custom_call.1} parent=11 // pred_region
          %s129 = ssub.s32 512, 512
          %130 = vsyncadd [#allocation6], %s129
          %s131 = sshll.u32 [#allocation5], 4
          %s132 = int_to_ptr.vmem [resolvable:$true] %s131
          %137 = dma.hbm_to_vmem [thread:$0]  %s1, 512, %s132, [#allocation6], 128, 128, 8
        $region16: #{tpu_custom_call.1} parent=11 // pred_fallthru
          _
        // Predicated region
        $region17: #{tpu_custom_call.1} parent=11 // pred_check
          %p138 = pneg %p84
        $region18: #{tpu_custom_call.1} parent=11 // pred_check_branch
          %140 = sbr.rel (%p138) target = $region20
        $region19: #{tpu_custom_call.1} parent=11 // pred_region
          _
        $region20: #{tpu_custom_call.1} parent=11 // pred_fallthru
          _
      $region12: #{tpu_custom_call.1} parent=5 // pred_fallthru
        _
      %p141 = scmp.lt.s32.totalorder %s16, 2
      // Predicated region
      $region21: #{tpu_custom_call.1} parent=5 // pred_check
        %p142 = pneg %p141
      $region22: #{tpu_custom_call.1} parent=5 // pred_check_branch
        %144 = sbr.rel (%p142) target = $region24
      $region23: #{tpu_custom_call.1} parent=5 // pred_region
        // Predicated region
        $region25: #{tpu_custom_call.1} parent=23 // pred_check
          %p145 = pneg %p36
        $region26: #{tpu_custom_call.1} parent=23 // pred_check_branch
          %147 = sbr.rel (%p145) target = $region28
        $region27: #{tpu_custom_call.1} parent=23 // pred_region
          %s148 = sand.u32 %s26, 1
          %s149 = scalar_lea.sflag [#allocation3], %s148
          %s150 = sand.u32 %s26, 1
          %s151 = smul.addr %s150, 8
          %s152 = scalar_lea.vmem [#allocation2], %s151
          %s154 = ssub.s32 128, 128
          %155 = vsyncadd %s149, %s154
          %s156 = smul.addr %s16, 128
          %s157 = scalar_lea.hbm %s0, %s156
          %s159 = sshll.u32 %s152, 4
          %s160 = int_to_ptr.vmem [resolvable:$true] %s159
          %162 = dma.hbm_to_vmem [thread:$0]  %s157, 128, %s160, %s149
        $region28: #{tpu_custom_call.1} parent=23 // pred_fallthru
          _
      $region24: #{tpu_custom_call.1} parent=5 // pred_fallthru
        _
      %p163 = scmp.le.s32.totalorder 1, %s16
      %p164 = scmp.lt.s32.totalorder %s16, 3
      %p165 = pnand %p163, %p164
      %p166 = pneg %p165
      // Predicated region
      $region29: #{tpu_custom_call.1} parent=5 // pred_check
        _
      $region30: #{tpu_custom_call.1} parent=5 // pred_check_branch
        %168 = sbr.rel (%p165) target = $region32
      $region31: #{tpu_custom_call.1} parent=5 // pred_region
        %s169 = ssub.s32 %s16, 1
        %s170 = sand.u32 %s29, 1
        %s171 = scalar_lea.sflag [#allocation3], %s170
        %s172 = sand.u32 %s29, 1
        %s173 = smul.addr %s172, 8
        %s174 = scalar_lea.vmem [#allocation2], %s173
        // Predicated region
        $region33: #{tpu_custom_call.1} parent=31 // pred_check
          %p175 = pneg %p42
        $region34: #{tpu_custom_call.1} parent=31 // pred_check_branch
          %177 = sbr.rel (%p175) target = $region36
        $region35: #{tpu_custom_call.1} parent=31 // pred_region
          %178 = dma.done %s171, 128
        $region36: #{tpu_custom_call.1} parent=31 // pred_fallthru
          _
        // Predicated region
        $region37: #{tpu_custom_call.1} parent=31 // pred_check
          %p179 = pneg %p63
        $region38: #{tpu_custom_call.1} parent=31 // pred_check_branch
          %181 = sbr.rel (%p179) target = $region40
        $region39: #{tpu_custom_call.1} parent=31 // pred_region
          %182 = dma.done [#allocation6], 512
        $region40: #{tpu_custom_call.1} parent=31 // pred_fallthru
          _
        %s183 = sand.u32 %s29, 1
        %s184 = scalar_lea.sflag [#allocation3], %s183
        %s185 = sand.u32 %s29, 1
        %s186 = smul.addr %s185, 8
        %s187 = scalar_lea.vmem [#allocation2], %s186
        %p188 = pneg %p42
        %p189 = pneg %p39
        %p190 = pneg %p63
        %p191 = pneg %p60
        %p192 = pneg %p84
        %p193 = pneg %p81
        %p194 = pneg %p110
        %p195 = pneg %p107
        %s196 = sand.u32 %s97, 1
        %s197 = scalar_lea.sflag [#allocation4], %s196
        %s198 = sand.u32 %s97, 1
        %s199 = smul.addr %s198, 8
        %s200 = scalar_lea.vmem [#allocation7], %s199
        %v201 = vld [vmem:[%s174] sm:$0xff]
        %v202 = vld [vmem:[#allocation5] sm:$0xff]
        %v203 = vld [vmem:[#allocation5 + $0x8] sm:$0xff]
        %v204 = vld [vmem:[#allocation5 + $0x10] sm:$0xff]
        %v205 = vld [vmem:[#allocation5 + $0x18] sm:$0xff]
        %v206 = vld [vmem:[%s2] sm:$0x1]
        %v208 = vlaneseq
        %v209 = vshrl.u32 %v208, 7
        %v210 = vsub.s32 0, %v209
        %v211 = vrot.slane %v206, %v210
        %vm213 = vcmask 261120
        %v215 = vsel %vm213, %v201, 0
        %217 = vmatprep.subr.mxu0 0.0
        %218 = vmatpush1.msra.mxu0 %v202
        %219 = vmatprep.subr.mxu0 0.0
        %220 = vmatpush1.msra.mxu0 %v203
        %221 = vmatprep.subr.mxu0 0.0
        %222 = vmatpush1.msra.mxu0 %v204
        %223 = vmatprep.subr.mxu0 0.0
        %224 = vmatpush1.msra.mxu0 %v205
        %225 = vmatprep.subr.mxu0 0.0
        %226 = vmatpush1.msra.mxu0 0.0
        %227 = vmatprep.subr.mxu0 0.0
        %228 = vmatpush1.msra.mxu0 0.0
        %229 = vmatprep.subr.mxu0 0.0
        %230 = vmatpush1.msra.mxu0 0.0
        %231 = vmatprep.subr.mxu0 0.0
        %232 = vmatpush1.msra.mxu0 0.0
        %233 = vmatprep.subr.mxu0 0.0
        %234 = vmatpush1.msra.mxu0 0.0
        %235 = vmatprep.subr.mxu0 0.0
        %236 = vmatpush1.msra.mxu0 0.0
        %237 = vmatprep.subr.mxu0 0.0
        %238 = vmatpush1.msra.mxu0 0.0
        %239 = vmatprep.subr.mxu0 0.0
        %240 = vmatpush1.msra.mxu0 0.0
        %241 = vmatprep.subr.mxu0 0.0
        %242 = vmatpush1.msra.mxu0 0.0
        %243 = vmatprep.subr.mxu0 0.0
        %244 = vmatpush1.msra.mxu0 0.0
        %245 = vmatprep.subr.mxu0 0.0
        %246 = vmatpush1.msra.mxu0 0.0
        %247 = vmatprep.subr.mxu0 0.0
        %248 = vmatpush1.msra.mxu0 0.0
        %249 = vmatprep.subr.mxu0 0.0
        %250 = vmatpush1.msra.mxu0 0.0
        %251 = vmatprep.subr.mxu0 0.0
        %252 = vmatpush1.msra.mxu0 0.0
        %253 = vmatprep.subr.mxu0 0.0
        %254 = vmatpush1.msra.mxu0 0.0
        %255 = vmatprep.subr.mxu0 0.0
        %256 = vmatpush1.msra.mxu0 0.0
        %257 = vmatprep.subr.mxu0 0.0
        %258 = vmatpush1.msra.mxu0 0.0
        %259 = vmatprep.subr.mxu0 0.0
        %260 = vmatpush1.msra.mxu0 0.0
        %261 = vmatprep.subr.mxu0 0.0
        %262 = vmatpush1.msra.mxu0 0.0
        %263 = vmatprep.subr.mxu0 0.0
        %264 = vmatpush1.msra.mxu0 0.0
        %265 = vmatprep.subr.mxu0 0.0
        %266 = vmatpush1.msra.mxu0 0.0
        %267 = vmatprep.subr.mxu0 0.0
        %268 = vmatpush1.msra.mxu0 0.0
        %269 = vmatprep.subr.mxu0 0.0
        %270 = vmatpush1.msra.mxu0 0.0
        %271 = vmatprep.subr.mxu0 0.0
        %272 = vmatpush1.msra.mxu0 0.0
        %273 = vmatprep.subr.mxu0 0.0
        %274 = vmatpush1.msra.mxu0 0.0
        %275 = vmatprep.subr.mxu0 0.0
        %276 = vmatpush1.msra.mxu0 0.0
        %277 = vmatprep.subr.mxu0 0.0
        %278 = vmatpush1.msra.mxu0 0.0
        %279 = vmatprep.subr.mxu0 0.0
        %280 = vmatpush1.msra.mxu0 0.0
        %281 = vmatprep.mubr.f32.mxu0 0.0
        %282 = vmatmul.mubr.f32.gmra.mrb[0].mxu0 %v215
        %v283 = vpop.f32.mrb[0].mxu0
        %v284 = vadd.f32 %v211, %v283
        %v285 = vpop.f32.mrb[0].mxu0
        %286 = vdwg.mxu0
        %v287 = vmul.f32 %v284, 0.35355338
        %289 = vrot.lane.b32.xlu0 %v284, 96
        %v290 = vpop.permute.xlu0 %289
        %vm291 = vcmask 64512
        %v293 = vsel %vm291, %v287, 0
        %v295 = vsel %vm291, %v290, 0
        %297 = vmatprep.subr.mxu0 0.0
        %298 = vmatpush1.xpose.msra.mxu0 %v295
        %299 = vmatprep.subr.mxu0 0.0
        %300 = vmatpush1.xpose.msra.mxu0 0.0
        %301 = vmatprep.subr.mxu0 0.0
        %302 = vmatpush1.xpose.msra.mxu0 0.0
        %303 = vmatprep.subr.mxu0 0.0
        %304 = vmatpush1.xpose.msra.mxu0 0.0
        %305 = vmatprep.subr.mxu0 0.0
        %306 = vmatpush1.xpose.msra.mxu0 0.0
        %307 = vmatprep.subr.mxu0 0.0
        %308 = vmatpush1.xpose.msra.mxu0 0.0
        %309 = vmatprep.subr.mxu0 0.0
        %310 = vmatpush1.xpose.msra.mxu0 0.0
        %311 = vmatprep.subr.mxu0 0.0
        %312 = vmatpush1.xpose.msra.mxu0 0.0
        %313 = vmatprep.subr.mxu0 0.0
        %314 = vmatpush1.xpose.msra.mxu0 0.0
        %315 = vmatprep.subr.mxu0 0.0
        %316 = vmatpush1.xpose.msra.mxu0 0.0
        %317 = vmatprep.subr.mxu0 0.0
        %318 = vmatpush1.xpose.msra.mxu0 0.0
        %319 = vmatprep.subr.mxu0 0.0
        %320 = vmatpush1.xpose.msra.mxu0 0.0
        %321 = vmatprep.subr.mxu0 0.0
        %322 = vmatpush1.xpose.msra.mxu0 0.0
        %323 = vmatprep.subr.mxu0 0.0
        %324 = vmatpush1.xpose.msra.mxu0 0.0
        %325 = vmatprep.subr.mxu0 0.0
        %326 = vmatpush1.xpose.msra.mxu0 0.0
        %327 = vmatprep.subr.mxu0 0.0
        %328 = vmatpush1.xpose.msra.mxu0 0.0
        %329 = vmatprep.subr.mxu0 0.0
        %330 = vmatpush1.xpose.msra.mxu0 0.0
        %331 = vmatprep.subr.mxu0 0.0
        %332 = vmatpush1.xpose.msra.mxu0 0.0
        %333 = vmatprep.subr.mxu0 0.0
        %334 = vmatpush1.xpose.msra.mxu0 0.0
        %335 = vmatprep.subr.mxu0 0.0
        %336 = vmatpush1.xpose.msra.mxu0 0.0
        %337 = vmatprep.subr.mxu0 0.0
        %338 = vmatpush1.xpose.msra.mxu0 0.0
        %339 = vmatprep.subr.mxu0 0.0
        %340 = vmatpush1.xpose.msra.mxu0 0.0
        %341 = vmatprep.subr.mxu0 0.0
        %342 = vmatpush1.xpose.msra.mxu0 0.0
        %343 = vmatprep.subr.mxu0 0.0
        %344 = vmatpush1.xpose.msra.mxu0 0.0
        %345 = vmatprep.subr.mxu0 0.0
        %346 = vmatpush1.xpose.msra.mxu0 0.0
        %347 = vmatprep.subr.mxu0 0.0
        %348 = vmatpush1.xpose.msra.mxu0 0.0
        %349 = vmatprep.subr.mxu0 0.0
        %350 = vmatpush1.xpose.msra.mxu0 0.0
        %351 = vmatprep.subr.mxu0 0.0
        %352 = vmatpush1.xpose.msra.mxu0 0.0
        %353 = vmatprep.subr.mxu0 0.0
        %354 = vmatpush1.xpose.msra.mxu0 0.0
        %355 = vmatprep.subr.mxu0 0.0
        %356 = vmatpush1.xpose.msra.mxu0 0.0
        %357 = vmatprep.subr.mxu0 0.0
        %358 = vmatpush1.xpose.msra.mxu0 0.0
        %359 = vmatprep.subr.mxu0 0.0
        %360 = vmatpush1.xpose.msra.mxu0 0.0
        %361 = vmatprep.mubr.f32.mxu0 0.0
        %362 = vmatmul.mubr.f32.gmra.mrb[0].mxu0 %v293
        %v363 = vpop.f32.mrb[0].mxu0
        %v364 = vadd.f32 0.0, %v363
        %v365 = vpop.f32.mrb[0].mxu0
        %366 = vdwg.mxu0
        %v367 = vsel %vm291, %v364, -inf
        %368 = vmax.xlane.f32.xlu0 %v367
        %v369 = vpop.xlane.xlu0 %368
        %v370 = vsub.f32 %v364, %v369
        %v371 = vmul.f32 %v370, 1.442695
        %v372 = vpow.pop %v371
        %v373 = vsel %vm291, %v372, 0.0
        %374 = vadd.xlane.f32.xlu0 %v373
        %v375 = vpop.xlane.xlu0 %374
        %v376 = vrcp.pop %v375
        %v377 = vmul.f32 %v372, %v376
        %378 = vrot.lane.b32.xlu0 %v284, 64
        %v379 = vpop.permute.xlu0 %378
        %v382 = vsel %vm291, %v377, 0
        %384 = vmatprep.subr.mxu0 0.0
        %385 = vmatpush1.msra.mxu0 %v379
        %386 = vmatprep.subr.mxu0 0.0
        %387 = vmatpush1.msra.mxu0 0.0
        %388 = vmatprep.subr.mxu0 0.0
        %389 = vmatpush1.msra.mxu0 0.0
        %390 = vmatprep.subr.mxu0 0.0
        %391 = vmatpush1.msra.mxu0 0.0
        %392 = vmatprep.subr.mxu0 0.0
        %393 = vmatpush1.msra.mxu0 0.0
        %394 = vmatprep.subr.mxu0 0.0
        %395 = vmatpush1.msra.mxu0 0.0
        %396 = vmatprep.subr.mxu0 0.0
        %397 = vmatpush1.msra.mxu0 0.0
        %398 = vmatprep.subr.mxu0 0.0
        %399 = vmatpush1.msra.mxu0 0.0
        %400 = vmatprep.subr.mxu0 0.0
        %401 = vmatpush1.msra.mxu0 0.0
        %402 = vmatprep.subr.mxu0 0.0
        %403 = vmatpush1.msra.mxu0 0.0
        %404 = vmatprep.subr.mxu0 0.0
        %405 = vmatpush1.msra.mxu0 0.0
        %406 = vmatprep.subr.mxu0 0.0
        %407 = vmatpush1.msra.mxu0 0.0
        %408 = vmatprep.subr.mxu0 0.0
        %409 = vmatpush1.msra.mxu0 0.0
        %410 = vmatprep.subr.mxu0 0.0
        %411 = vmatpush1.msra.mxu0 0.0
        %412 = vmatprep.subr.mxu0 0.0
        %413 = vmatpush1.msra.mxu0 0.0
        %414 = vmatprep.subr.mxu0 0.0
        %415 = vmatpush1.msra.mxu0 0.0
        %416 = vmatprep.subr.mxu0 0.0
        %417 = vmatpush1.msra.mxu0 0.0
        %418 = vmatprep.subr.mxu0 0.0
        %419 = vmatpush1.msra.mxu0 0.0
        %420 = vmatprep.subr.mxu0 0.0
        %421 = vmatpush1.msra.mxu0 0.0
        %422 = vmatprep.subr.mxu0 0.0
        %423 = vmatpush1.msra.mxu0 0.0
        %424 = vmatprep.subr.mxu0 0.0
        %425 = vmatpush1.msra.mxu0 0.0
        %426 = vmatprep.subr.mxu0 0.0
        %427 = vmatpush1.msra.mxu0 0.0
        %428 = vmatprep.subr.mxu0 0.0
        %429 = vmatpush1.msra.mxu0 0.0
        %430 = vmatprep.subr.mxu0 0.0
        %431 = vmatpush1.msra.mxu0 0.0
        %432 = vmatprep.subr.mxu0 0.0
        %433 = vmatpush1.msra.mxu0 0.0
        %434 = vmatprep.subr.mxu0 0.0
        %435 = vmatpush1.msra.mxu0 0.0
        %436 = vmatprep.subr.mxu0 0.0
        %437 = vmatpush1.msra.mxu0 0.0
        %438 = vmatprep.subr.mxu0 0.0
        %439 = vmatpush1.msra.mxu0 0.0
        %440 = vmatprep.subr.mxu0 0.0
        %441 = vmatpush1.msra.mxu0 0.0
        %442 = vmatprep.subr.mxu0 0.0
        %443 = vmatpush1.msra.mxu0 0.0
        %444 = vmatprep.subr.mxu0 0.0
        %445 = vmatpush1.msra.mxu0 0.0
        %446 = vmatprep.subr.mxu0 0.0
        %447 = vmatpush1.msra.mxu0 0.0
        %448 = vmatprep.mubr.f32.mxu0 0.0
        %449 = vmatmul.mubr.f32.gmra.mrb[0].mxu0 %v382
        %v450 = vpop.f32.mrb[0].mxu0
        %v451 = vadd.f32 0.0, %v450
        %v452 = vpop.f32.mrb[0].mxu0
        %453 = vdwg.mxu0
        %454 = vrot.lane.b32.xlu0 %v287, 120
        %v455 = vpop.permute.xlu0 %454
        %456 = vrot.lane.b32.xlu0 %v284, 88
        %v457 = vpop.permute.xlu0 %456
        %v458 = vsel %vm291, %v455, 0
        %v460 = vsel %vm291, %v457, 0
        %462 = vmatprep.subr.mxu0 0.0
        %463 = vmatpush1.xpose.msra.mxu0 %v460
        %464 = vmatprep.subr.mxu0 0.0
        %465 = vmatpush1.xpose.msra.mxu0 0.0
        %466 = vmatprep.subr.mxu0 0.0
        %467 = vmatpush1.xpose.msra.mxu0 0.0
        %468 = vmatprep.subr.mxu0 0.0
        %469 = vmatpush1.xpose.msra.mxu0 0.0
        %470 = vmatprep.subr.mxu0 0.0
        %471 = vmatpush1.xpose.msra.mxu0 0.0
        %472 = vmatprep.subr.mxu0 0.0
        %473 = vmatpush1.xpose.msra.mxu0 0.0
        %474 = vmatprep.subr.mxu0 0.0
        %475 = vmatpush1.xpose.msra.mxu0 0.0
        %476 = vmatprep.subr.mxu0 0.0
        %477 = vmatpush1.xpose.msra.mxu0 0.0
        %478 = vmatprep.subr.mxu0 0.0
        %479 = vmatpush1.xpose.msra.mxu0 0.0
        %480 = vmatprep.subr.mxu0 0.0
        %481 = vmatpush1.xpose.msra.mxu0 0.0
        %482 = vmatprep.subr.mxu0 0.0
        %483 = vmatpush1.xpose.msra.mxu0 0.0
        %484 = vmatprep.subr.mxu0 0.0
        %485 = vmatpush1.xpose.msra.mxu0 0.0
        %486 = vmatprep.subr.mxu0 0.0
        %487 = vmatpush1.xpose.msra.mxu0 0.0
        %488 = vmatprep.subr.mxu0 0.0
        %489 = vmatpush1.xpose.msra.mxu0 0.0
        %490 = vmatprep.subr.mxu0 0.0
        %491 = vmatpush1.xpose.msra.mxu0 0.0
        %492 = vmatprep.subr.mxu0 0.0
        %493 = vmatpush1.xpose.msra.mxu0 0.0
        %494 = vmatprep.subr.mxu0 0.0
        %495 = vmatpush1.xpose.msra.mxu0 0.0
        %496 = vmatprep.subr.mxu0 0.0
        %497 = vmatpush1.xpose.msra.mxu0 0.0
        %498 = vmatprep.subr.mxu0 0.0
        %499 = vmatpush1.xpose.msra.mxu0 0.0
        %500 = vmatprep.subr.mxu0 0.0
        %501 = vmatpush1.xpose.msra.mxu0 0.0
        %502 = vmatprep.subr.mxu0 0.0
        %503 = vmatpush1.xpose.msra.mxu0 0.0
        %504 = vmatprep.subr.mxu0 0.0
        %505 = vmatpush1.xpose.msra.mxu0 0.0
        %506 = vmatprep.subr.mxu0 0.0
        %507 = vmatpush1.xpose.msra.mxu0 0.0
        %508 = vmatprep.subr.mxu0 0.0
        %509 = vmatpush1.xpose.msra.mxu0 0.0
        %510 = vmatprep.subr.mxu0 0.0
        %511 = vmatpush1.xpose.msra.mxu0 0.0
        %512 = vmatprep.subr.mxu0 0.0
        %513 = vmatpush1.xpose.msra.mxu0 0.0
        %514 = vmatprep.subr.mxu0 0.0
        %515 = vmatpush1.xpose.msra.mxu0 0.0
        %516 = vmatprep.subr.mxu0 0.0
        %517 = vmatpush1.xpose.msra.mxu0 0.0
        %518 = vmatprep.subr.mxu0 0.0
        %519 = vmatpush1.xpose.msra.mxu0 0.0
        %520 = vmatprep.subr.mxu0 0.0
        %521 = vmatpush1.xpose.msra.mxu0 0.0
        %522 = vmatprep.subr.mxu0 0.0
        %523 = vmatpush1.xpose.msra.mxu0 0.0
        %524 = vmatprep.subr.mxu0 0.0
        %525 = vmatpush1.xpose.msra.mxu0 0.0
        %526 = vmatprep.mubr.f32.mxu0 0.0
        %527 = vmatmul.mubr.f32.gmra.mrb[0].mxu0 %v458
        %v528 = vpop.f32.mrb[0].mxu0
        %v529 = vadd.f32 0.0, %v528
        %v530 = vpop.f32.mrb[0].mxu0
        %531 = vdwg.mxu0
        %v532 = vsel %vm291, %v529, -inf
        %533 = vmax.xlane.f32.xlu0 %v532
        %v534 = vpop.xlane.xlu0 %533
        %v535 = vsub.f32 %v529, %v534
        %v536 = vmul.f32 %v535, 1.442695
        %v537 = vpow.pop %v536
        %v538 = vsel %vm291, %v537, 0.0
        %539 = vadd.xlane.f32.xlu0 %v538
        %v540 = vpop.xlane.xlu0 %539
        %v541 = vrcp.pop %v540
        %v542 = vmul.f32 %v537, %v541
        %543 = vrot.lane.b32.xlu0 %v284, 56
        %v544 = vpop.permute.xlu0 %543
        %v547 = vsel %vm291, %v542, 0
        %549 = vmatprep.subr.mxu0 0.0
        %550 = vmatpush1.msra.mxu0 %v544
        %551 = vmatprep.subr.mxu0 0.0
        %552 = vmatpush1.msra.mxu0 0.0
        %553 = vmatprep.subr.mxu0 0.0
        %554 = vmatpush1.msra.mxu0 0.0
        %555 = vmatprep.subr.mxu0 0.0
        %556 = vmatpush1.msra.mxu0 0.0
        %557 = vmatprep.subr.mxu0 0.0
        %558 = vmatpush1.msra.mxu0 0.0
        %559 = vmatprep.subr.mxu0 0.0
        %560 = vmatpush1.msra.mxu0 0.0
        %561 = vmatprep.subr.mxu0 0.0
        %562 = vmatpush1.msra.mxu0 0.0
        %563 = vmatprep.subr.mxu0 0.0
        %564 = vmatpush1.msra.mxu0 0.0
        %565 = vmatprep.subr.mxu0 0.0
        %566 = vmatpush1.msra.mxu0 0.0
        %567 = vmatprep.subr.mxu0 0.0
        %568 = vmatpush1.msra.mxu0 0.0
        %569 = vmatprep.subr.mxu0 0.0
        %570 = vmatpush1.msra.mxu0 0.0
        %571 = vmatprep.subr.mxu0 0.0
        %572 = vmatpush1.msra.mxu0 0.0
        %573 = vmatprep.subr.mxu0 0.0
        %574 = vmatpush1.msra.mxu0 0.0
        %575 = vmatprep.subr.mxu0 0.0
        %576 = vmatpush1.msra.mxu0 0.0
        %577 = vmatprep.subr.mxu0 0.0
        %578 = vmatpush1.msra.mxu0 0.0
        %579 = vmatprep.subr.mxu0 0.0
        %580 = vmatpush1.msra.mxu0 0.0
        %581 = vmatprep.subr.mxu0 0.0
        %582 = vmatpush1.msra.mxu0 0.0
        %583 = vmatprep.subr.mxu0 0.0
        %584 = vmatpush1.msra.mxu0 0.0
        %585 = vmatprep.subr.mxu0 0.0
        %586 = vmatpush1.msra.mxu0 0.0
        %587 = vmatprep.subr.mxu0 0.0
        %588 = vmatpush1.msra.mxu0 0.0
        %589 = vmatprep.subr.mxu0 0.0
        %590 = vmatpush1.msra.mxu0 0.0
        %591 = vmatprep.subr.mxu0 0.0
        %592 = vmatpush1.msra.mxu0 0.0
        %593 = vmatprep.subr.mxu0 0.0
        %594 = vmatpush1.msra.mxu0 0.0
        %595 = vmatprep.subr.mxu0 0.0
        %596 = vmatpush1.msra.mxu0 0.0
        %597 = vmatprep.subr.mxu0 0.0
        %598 = vmatpush1.msra.mxu0 0.0
        %599 = vmatprep.subr.mxu0 0.0
        %600 = vmatpush1.msra.mxu0 0.0
        %601 = vmatprep.subr.mxu0 0.0
        %602 = vmatpush1.msra.mxu0 0.0
        %603 = vmatprep.subr.mxu0 0.0
        %604 = vmatpush1.msra.mxu0 0.0
        %605 = vmatprep.subr.mxu0 0.0
        %606 = vmatpush1.msra.mxu0 0.0
        %607 = vmatprep.subr.mxu0 0.0
        %608 = vmatpush1.msra.mxu0 0.0
        %609 = vmatprep.subr.mxu0 0.0
        %610 = vmatpush1.msra.mxu0 0.0
        %611 = vmatprep.subr.mxu0 0.0
        %612 = vmatpush1.msra.mxu0 0.0
        %613 = vmatprep.mubr.f32.mxu0 0.0
        %614 = vmatmul.mubr.f32.gmra.mrb[0].mxu0 %v547
        %v615 = vpop.f32.mrb[0].mxu0
        %v616 = vadd.f32 0.0, %v615
        %v617 = vpop.f32.mrb[0].mxu0
        %618 = vdwg.mxu0
        %619 = vrot.lane.b32.xlu0 %v287, 112
        %v620 = vpop.permute.xlu0 %619
        %621 = vrot.lane.b32.xlu0 %v284, 80
        %v622 = vpop.permute.xlu0 %621
        %v623 = vsel %vm291, %v620, 0
        %v625 = vsel %vm291, %v622, 0
        %627 = vmatprep.subr.mxu0 0.0
        %628 = vmatpush1.xpose.msra.mxu0 %v625
        %629 = vmatprep.subr.mxu0 0.0
        %630 = vmatpush1.xpose.msra.mxu0 0.0
        %631 = vmatprep.subr.mxu0 0.0
        %632 = vmatpush1.xpose.msra.mxu0 0.0
        %633 = vmatprep.subr.mxu0 0.0
        %634 = vmatpush1.xpose.msra.mxu0 0.0
        %635 = vmatprep.subr.mxu0 0.0
        %636 = vmatpush1.xpose.msra.mxu0 0.0
        %637 = vmatprep.subr.mxu0 0.0
        %638 = vmatpush1.xpose.msra.mxu0 0.0
        %639 = vmatprep.subr.mxu0 0.0
        %640 = vmatpush1.xpose.msra.mxu0 0.0
        %641 = vmatprep.subr.mxu0 0.0
        %642 = vmatpush1.xpose.msra.mxu0 0.0
        %643 = vmatprep.subr.mxu0 0.0
        %644 = vmatpush1.xpose.msra.mxu0 0.0
        %645 = vmatprep.subr.mxu0 0.0
        %646 = vmatpush1.xpose.msra.mxu0 0.0
        %647 = vmatprep.subr.mxu0 0.0
        %648 = vmatpush1.xpose.msra.mxu0 0.0
        %649 = vmatprep.subr.mxu0 0.0
        %650 = vmatpush1.xpose.msra.mxu0 0.0
        %651 = vmatprep.subr.mxu0 0.0
        %652 = vmatpush1.xpose.msra.mxu0 0.0
        %653 = vmatprep.subr.mxu0 0.0
        %654 = vmatpush1.xpose.msra.mxu0 0.0
        %655 = vmatprep.subr.mxu0 0.0
        %656 = vmatpush1.xpose.msra.mxu0 0.0
        %657 = vmatprep.subr.mxu0 0.0
        %658 = vmatpush1.xpose.msra.mxu0 0.0
        %659 = vmatprep.subr.mxu0 0.0
        %660 = vmatpush1.xpose.msra.mxu0 0.0
        %661 = vmatprep.subr.mxu0 0.0
        %662 = vmatpush1.xpose.msra.mxu0 0.0
        %663 = vmatprep.subr.mxu0 0.0
        %664 = vmatpush1.xpose.msra.mxu0 0.0
        %665 = vmatprep.subr.mxu0 0.0
        %666 = vmatpush1.xpose.msra.mxu0 0.0
        %667 = vmatprep.subr.mxu0 0.0
        %668 = vmatpush1.xpose.msra.mxu0 0.0
        %669 = vmatprep.subr.mxu0 0.0
        %670 = vmatpush1.xpose.msra.mxu0 0.0
        %671 = vmatprep.subr.mxu0 0.0
        %672 = vmatpush1.xpose.msra.mxu0 0.0
        %673 = vmatprep.subr.mxu0 0.0
        %674 = vmatpush1.xpose.msra.mxu0 0.0
        %675 = vmatprep.subr.mxu0 0.0
        %676 = vmatpush1.xpose.msra.mxu0 0.0
        %677 = vmatprep.subr.mxu0 0.0
        %678 = vmatpush1.xpose.msra.mxu0 0.0
        %679 = vmatprep.subr.mxu0 0.0
        %680 = vmatpush1.xpose.msra.mxu0 0.0
        %681 = vmatprep.subr.mxu0 0.0
        %682 = vmatpush1.xpose.msra.mxu0 0.0
        %683 = vmatprep.subr.mxu0 0.0
        %684 = vmatpush1.xpose.msra.mxu0 0.0
        %685 = vmatprep.subr.mxu0 0.0
        %686 = vmatpush1.xpose.msra.mxu0 0.0
        %687 = vmatprep.subr.mxu0 0.0
        %688 = vmatpush1.xpose.msra.mxu0 0.0
        %689 = vmatprep.subr.mxu0 0.0
        %690 = vmatpush1.xpose.msra.mxu0 0.0
        %691 = vmatprep.mubr.f32.mxu0 0.0
        %692 = vmatmul.mubr.f32.gmra.mrb[0].mxu0 %v623
        %v693 = vpop.f32.mrb[0].mxu0
        %v694 = vadd.f32 0.0, %v693
        %v695 = vpop.f32.mrb[0].mxu0
        %696 = vdwg.mxu0
        %v697 = vsel %vm291, %v694, -inf
        %698 = vmax.xlane.f32.xlu0 %v697
        %v699 = vpop.xlane.xlu0 %698
        %v700 = vsub.f32 %v694, %v699
        %v701 = vmul.f32 %v700, 1.442695
        %v702 = vpow.pop %v701
        %v703 = vsel %vm291, %v702, 0.0
        %704 = vadd.xlane.f32.xlu0 %v703
        %v705 = vpop.xlane.xlu0 %704
        %v706 = vrcp.pop %v705
        %v707 = vmul.f32 %v702, %v706
        %708 = vrot.lane.b32.xlu0 %v284, 48
        %v709 = vpop.permute.xlu0 %708
        %v712 = vsel %vm291, %v707, 0
        %714 = vmatprep.subr.mxu0 0.0
        %715 = vmatpush1.msra.mxu0 %v709
        %716 = vmatprep.subr.mxu0 0.0
        %717 = vmatpush1.msra.mxu0 0.0
        %718 = vmatprep.subr.mxu0 0.0
        %719 = vmatpush1.msra.mxu0 0.0
        %720 = vmatprep.subr.mxu0 0.0
        %721 = vmatpush1.msra.mxu0 0.0
        %722 = vmatprep.subr.mxu0 0.0
        %723 = vmatpush1.msra.mxu0 0.0
        %724 = vmatprep.subr.mxu0 0.0
        %725 = vmatpush1.msra.mxu0 0.0
        %726 = vmatprep.subr.mxu0 0.0
        %727 = vmatpush1.msra.mxu0 0.0
        %728 = vmatprep.subr.mxu0 0.0
        %729 = vmatpush1.msra.mxu0 0.0
        %730 = vmatprep.subr.mxu0 0.0
        %731 = vmatpush1.msra.mxu0 0.0
        %732 = vmatprep.subr.mxu0 0.0
        %733 = vmatpush1.msra.mxu0 0.0
        %734 = vmatprep.subr.mxu0 0.0
        %735 = vmatpush1.msra.mxu0 0.0
        %736 = vmatprep.subr.mxu0 0.0
        %737 = vmatpush1.msra.mxu0 0.0
        %738 = vmatprep.subr.mxu0 0.0
        %739 = vmatpush1.msra.mxu0 0.0
        %740 = vmatprep.subr.mxu0 0.0
        %741 = vmatpush1.msra.mxu0 0.0
        %742 = vmatprep.subr.mxu0 0.0
        %743 = vmatpush1.msra.mxu0 0.0
        %744 = vmatprep.subr.mxu0 0.0
        %745 = vmatpush1.msra.mxu0 0.0
        %746 = vmatprep.subr.mxu0 0.0
        %747 = vmatpush1.msra.mxu0 0.0
        %748 = vmatprep.subr.mxu0 0.0
        %749 = vmatpush1.msra.mxu0 0.0
        %750 = vmatprep.subr.mxu0 0.0
        %751 = vmatpush1.msra.mxu0 0.0
        %752 = vmatprep.subr.mxu0 0.0
        %753 = vmatpush1.msra.mxu0 0.0
        %754 = vmatprep.subr.mxu0 0.0
        %755 = vmatpush1.msra.mxu0 0.0
        %756 = vmatprep.subr.mxu0 0.0
        %757 = vmatpush1.msra.mxu0 0.0
        %758 = vmatprep.subr.mxu0 0.0
        %759 = vmatpush1.msra.mxu0 0.0
        %760 = vmatprep.subr.mxu0 0.0
        %761 = vmatpush1.msra.mxu0 0.0
        %762 = vmatprep.subr.mxu0 0.0
        %763 = vmatpush1.msra.mxu0 0.0
        %764 = vmatprep.subr.mxu0 0.0
        %765 = vmatpush1.msra.mxu0 0.0
        %766 = vmatprep.subr.mxu0 0.0
        %767 = vmatpush1.msra.mxu0 0.0
        %768 = vmatprep.subr.mxu0 0.0
        %769 = vmatpush1.msra.mxu0 0.0
        %770 = vmatprep.subr.mxu0 0.0
        %771 = vmatpush1.msra.mxu0 0.0
        %772 = vmatprep.subr.mxu0 0.0
        %773 = vmatpush1.msra.mxu0 0.0
        %774 = vmatprep.subr.mxu0 0.0
        %775 = vmatpush1.msra.mxu0 0.0
        %776 = vmatprep.subr.mxu0 0.0
        %777 = vmatpush1.msra.mxu0 0.0
        %778 = vmatprep.mubr.f32.mxu0 0.0
        %779 = vmatmul.mubr.f32.gmra.mrb[0].mxu0 %v712
        %v780 = vpop.f32.mrb[0].mxu0
        %v781 = vadd.f32 0.0, %v780
        %v782 = vpop.f32.mrb[0].mxu0
        %783 = vdwg.mxu0
        %784 = vrot.lane.b32.xlu0 %v287, 104
        %v785 = vpop.permute.xlu0 %784
        %786 = vrot.lane.b32.xlu0 %v284, 72
        %v787 = vpop.permute.xlu0 %786
        %v788 = vsel %vm291, %v785, 0
        %v790 = vsel %vm291, %v787, 0
        %792 = vmatprep.subr.mxu0 0.0
        %793 = vmatpush1.xpose.msra.mxu0 %v790
        %794 = vmatprep.subr.mxu0 0.0
        %795 = vmatpush1.xpose.msra.mxu0 0.0
        %796 = vmatprep.subr.mxu0 0.0
        %797 = vmatpush1.xpose.msra.mxu0 0.0
        %798 = vmatprep.subr.mxu0 0.0
        %799 = vmatpush1.xpose.msra.mxu0 0.0
        %800 = vmatprep.subr.mxu0 0.0
        %801 = vmatpush1.xpose.msra.mxu0 0.0
        %802 = vmatprep.subr.mxu0 0.0
        %803 = vmatpush1.xpose.msra.mxu0 0.0
        %804 = vmatprep.subr.mxu0 0.0
        %805 = vmatpush1.xpose.msra.mxu0 0.0
        %806 = vmatprep.subr.mxu0 0.0
        %807 = vmatpush1.xpose.msra.mxu0 0.0
        %808 = vmatprep.subr.mxu0 0.0
        %809 = vmatpush1.xpose.msra.mxu0 0.0
        %810 = vmatprep.subr.mxu0 0.0
        %811 = vmatpush1.xpose.msra.mxu0 0.0
        %812 = vmatprep.subr.mxu0 0.0
        %813 = vmatpush1.xpose.msra.mxu0 0.0
        %814 = vmatprep.subr.mxu0 0.0
        %815 = vmatpush1.xpose.msra.mxu0 0.0
        %816 = vmatprep.subr.mxu0 0.0
        %817 = vmatpush1.xpose.msra.mxu0 0.0
        %818 = vmatprep.subr.mxu0 0.0
        %819 = vmatpush1.xpose.msra.mxu0 0.0
        %820 = vmatprep.subr.mxu0 0.0
        %821 = vmatpush1.xpose.msra.mxu0 0.0
        %822 = vmatprep.subr.mxu0 0.0
        %823 = vmatpush1.xpose.msra.mxu0 0.0
        %824 = vmatprep.subr.mxu0 0.0
        %825 = vmatpush1.xpose.msra.mxu0 0.0
        %826 = vmatprep.subr.mxu0 0.0
        %827 = vmatpush1.xpose.msra.mxu0 0.0
        %828 = vmatprep.subr.mxu0 0.0
        %829 = vmatpush1.xpose.msra.mxu0 0.0
        %830 = vmatprep.subr.mxu0 0.0
        %831 = vmatpush1.xpose.msra.mxu0 0.0
        %832 = vmatprep.subr.mxu0 0.0
        %833 = vmatpush1.xpose.msra.mxu0 0.0
        %834 = vmatprep.subr.mxu0 0.0
        %835 = vmatpush1.xpose.msra.mxu0 0.0
        %836 = vmatprep.subr.mxu0 0.0
        %837 = vmatpush1.xpose.msra.mxu0 0.0
        %838 = vmatprep.subr.mxu0 0.0
        %839 = vmatpush1.xpose.msra.mxu0 0.0
        %840 = vmatprep.subr.mxu0 0.0
        %841 = vmatpush1.xpose.msra.mxu0 0.0
        %842 = vmatprep.subr.mxu0 0.0
        %843 = vmatpush1.xpose.msra.mxu0 0.0
        %844 = vmatprep.subr.mxu0 0.0
        %845 = vmatpush1.xpose.msra.mxu0 0.0
        %846 = vmatprep.subr.mxu0 0.0
        %847 = vmatpush1.xpose.msra.mxu0 0.0
        %848 = vmatprep.subr.mxu0 0.0
        %849 = vmatpush1.xpose.msra.mxu0 0.0
        %850 = vmatprep.subr.mxu0 0.0
        %851 = vmatpush1.xpose.msra.mxu0 0.0
        %852 = vmatprep.subr.mxu0 0.0
        %853 = vmatpush1.xpose.msra.mxu0 0.0
        %854 = vmatprep.subr.mxu0 0.0
        %855 = vmatpush1.xpose.msra.mxu0 0.0
        %856 = vmatprep.mubr.f32.mxu0 0.0
        %857 = vmatmul.mubr.f32.gmra.mrb[0].mxu0 %v788
        %v858 = vpop.f32.mrb[0].mxu0
        %v859 = vadd.f32 0.0, %v858
        %v860 = vpop.f32.mrb[0].mxu0
        %861 = vdwg.mxu0
        %v862 = vsel %vm291, %v859, -inf
        %863 = vmax.xlane.f32.xlu0 %v862
        %v864 = vpop.xlane.xlu0 %863
        %v865 = vsub.f32 %v859, %v864
        %v866 = vmul.f32 %v865, 1.442695
        %v867 = vpow.pop %v866
        %v868 = vsel %vm291, %v867, 0.0
        %869 = vadd.xlane.f32.xlu0 %v868
        %v870 = vpop.xlane.xlu0 %869
        %v871 = vrcp.pop %v870
        %v872 = vmul.f32 %v867, %v871
        %873 = vrot.lane.b32.xlu0 %v284, 40
        %v874 = vpop.permute.xlu0 %873
        %v877 = vsel %vm291, %v872, 0
        %879 = vmatprep.subr.mxu0 0.0
        %880 = vmatpush1.msra.mxu0 %v874
        %881 = vmatprep.subr.mxu0 0.0
        %882 = vmatpush1.msra.mxu0 0.0
        %883 = vmatprep.subr.mxu0 0.0
        %884 = vmatpush1.msra.mxu0 0.0
        %885 = vmatprep.subr.mxu0 0.0
        %886 = vmatpush1.msra.mxu0 0.0
        %887 = vmatprep.subr.mxu0 0.0
        %888 = vmatpush1.msra.mxu0 0.0
        %889 = vmatprep.subr.mxu0 0.0
        %890 = vmatpush1.msra.mxu0 0.0
        %891 = vmatprep.subr.mxu0 0.0
        %892 = vmatpush1.msra.mxu0 0.0
        %893 = vmatprep.subr.mxu0 0.0
        %894 = vmatpush1.msra.mxu0 0.0
        %895 = vmatprep.subr.mxu0 0.0
        %896 = vmatpush1.msra.mxu0 0.0
        %897 = vmatprep.subr.mxu0 0.0
        %898 = vmatpush1.msra.mxu0 0.0
        %899 = vmatprep.subr.mxu0 0.0
        %900 = vmatpush1.msra.mxu0 0.0
        %901 = vmatprep.subr.mxu0 0.0
        %902 = vmatpush1.msra.mxu0 0.0
        %903 = vmatprep.subr.mxu0 0.0
        %904 = vmatpush1.msra.mxu0 0.0
        %905 = vmatprep.subr.mxu0 0.0
        %906 = vmatpush1.msra.mxu0 0.0
        %907 = vmatprep.subr.mxu0 0.0
        %908 = vmatpush1.msra.mxu0 0.0
        %909 = vmatprep.subr.mxu0 0.0
        %910 = vmatpush1.msra.mxu0 0.0
        %911 = vmatprep.subr.mxu0 0.0
        %912 = vmatpush1.msra.mxu0 0.0
        %913 = vmatprep.subr.mxu0 0.0
        %914 = vmatpush1.msra.mxu0 0.0
        %915 = vmatprep.subr.mxu0 0.0
        %916 = vmatpush1.msra.mxu0 0.0
        %917 = vmatprep.subr.mxu0 0.0
        %918 = vmatpush1.msra.mxu0 0.0
        %919 = vmatprep.subr.mxu0 0.0
        %920 = vmatpush1.msra.mxu0 0.0
        %921 = vmatprep.subr.mxu0 0.0
        %922 = vmatpush1.msra.mxu0 0.0
        %923 = vmatprep.subr.mxu0 0.0
        %924 = vmatpush1.msra.mxu0 0.0
        %925 = vmatprep.subr.mxu0 0.0
        %926 = vmatpush1.msra.mxu0 0.0
        %927 = vmatprep.subr.mxu0 0.0
        %928 = vmatpush1.msra.mxu0 0.0
        %929 = vmatprep.subr.mxu0 0.0
        %930 = vmatpush1.msra.mxu0 0.0
        %931 = vmatprep.subr.mxu0 0.0
        %932 = vmatpush1.msra.mxu0 0.0
        %933 = vmatprep.subr.mxu0 0.0
        %934 = vmatpush1.msra.mxu0 0.0
        %935 = vmatprep.subr.mxu0 0.0
        %936 = vmatpush1.msra.mxu0 0.0
        %937 = vmatprep.subr.mxu0 0.0
        %938 = vmatpush1.msra.mxu0 0.0
        %939 = vmatprep.subr.mxu0 0.0
        %940 = vmatpush1.msra.mxu0 0.0
        %941 = vmatprep.subr.mxu0 0.0
        %942 = vmatpush1.msra.mxu0 0.0
        %943 = vmatprep.mubr.f32.mxu0 0.0
        %944 = vmatmul.mubr.f32.gmra.mrb[0].mxu0 %v877
        %v945 = vpop.f32.mrb[0].mxu0
        %v946 = vadd.f32 0.0, %v945
        %v947 = vpop.f32.mrb[0].mxu0
        %948 = vdwg.mxu0
        %950 = vrot.lane.b32.xlu0 %v616, 8
        %v951 = vpop.permute.xlu0 %950
        %954 = vrot.lane.b32.xlu0 %v781, 16
        %v955 = vpop.permute.xlu0 %954
        %958 = vrot.lane.b32.xlu0 %v946, 24
        %v959 = vpop.permute.xlu0 %958
        %v961 = vsel %vm291, %v451, %v951
        %vm962 = vcmask 130048
        %v963 = vsel %vm962, %v961, %v955
        %vm964 = vcmask 195584
        %v965 = vsel %vm964, %v963, %v959
        %966 = vst.msk [vmem:[%s200] sm:$0xff] %vm213, %v965
        %s967 = sand.u32 %s97, 1
        %s968 = scalar_lea.sflag [#allocation4], %s967
        %s969 = sand.u32 %s97, 1
        %s970 = smul.addr %s969, 8
        %s971 = scalar_lea.vmem [#allocation7], %s970
        // Predicated region
        $region41: #{tpu_custom_call.1} parent=31 // pred_check
          %p972 = pneg %p107
        $region42: #{tpu_custom_call.1} parent=31 // pred_check_branch
          %974 = sbr.rel (%p972) target = $region44
        $region43: #{tpu_custom_call.1} parent=31 // pred_region
          %s976 = ssub.s32 128, 128
          %977 = vsyncadd %s968, %s976
          %s978 = smul.addr %s21, 128
          %s979 = scalar_lea.hbm %s3, %s978
          %s981 = sshll.u32 %s971, 4
          %s982 = int_to_ptr.vmem [resolvable:$true] %s981
          %984 = dma.vmem_to_hbm [thread:$0]  %s982, 128, %s979, %s968
        $region44: #{tpu_custom_call.1} parent=31 // pred_fallthru
          _
      $region32: #{tpu_custom_call.1} parent=5 // pred_fallthru
        _
      %p985 = scmp.le.s32.totalorder 2, %s16
      // Predicated region
      $region45: #{tpu_custom_call.1} parent=5 // pred_check
        %p986 = pneg %p985
      $region46: #{tpu_custom_call.1} parent=5 // pred_check_branch
        %988 = sbr.rel (%p986) target = $region48
      $region47: #{tpu_custom_call.1} parent=5 // pred_region
        %s989 = ssub.s32 %s16, 2
        // Predicated region
        $region49: #{tpu_custom_call.1} parent=47 // pred_check
          %p990 = pneg %p113
        $region50: #{tpu_custom_call.1} parent=47 // pred_check_branch
          %992 = sbr.rel (%p990) target = $region52
        $region51: #{tpu_custom_call.1} parent=47 // pred_region
          %s993 = sand.u32 %s98, 1
          %s994 = scalar_lea.sflag [#allocation4], %s993
          %s995 = sand.u32 %s98, 1
          %s996 = smul.addr %s995, 8
          %s997 = scalar_lea.vmem [#allocation7], %s996
          %998 = dma.done %s994, 128
        $region52: #{tpu_custom_call.1} parent=47 // pred_fallthru
          _
      $region48: #{tpu_custom_call.1} parent=5 // pred_fallthru
        _
    $region6: #{tpu_custom_call.1} parent=1 // loop_footer
      %s20 = sadd.s32 1, %s16
    $region7: #{tpu_custom_call.1} parent=1 // loop_footer_branch
      %15 = sbr.rel target = $region3
    $region8: #{tpu_custom_call.1} parent=1 // loop_exit
      _
    %999 = vsyncpa [#allocation3], 1
    %s1000 = scalar_lea.sflag [#allocation3], 1
    %1001 = vsyncpa %s1000, 1
    %1002 = vsyncpa [#allocation6], 1
    %1003 = vsyncpa [#allocation4], 1
    %s1004 = scalar_lea.sflag [#allocation4], 1
    %1005 = vsyncpa %s1004, 1

</llo_original>
